<compile_context>
chip_gen: v7x
topology: tpu7x:2x2x1
jax: 0.10.0
libtpu: 0.0.40
codegen_flags: <defaults>
</compile_context>

<pallas_src>
import jax
import jax.numpy as jnp
from jax.experimental import pallas as pl
from jax.experimental.pallas import tpu as pltpu

_LANE = 128  # MXU / vreg lane width; every packed tile is 128 wide.


def _round_up(n, m):
    return ((n + m - 1) // m) * m


def _net_kernel(x_ref, w_ref, b_ref, out_ref):
    """Fused 3-matmul forward for one batch tile.

    x_ref  : (TB, 128)  bf16  state, zero-padded in cols s_dim:128
    w_ref  : (384, 128) bf16  [W1_pad ; Wcat_pad ; Wblk_pad] (three 128x128 tiles)
    b_ref  : (3, 128)   f32   [b1_pad ; bcat_pad ; bblk_pad]
    out_ref: (TB, 128)  f32   cols 0:a_dim -> logits, col a_dim -> value, rest 0
    """
    x = x_ref[...]
    b = b_ref[...]

    # layer 1: pi1 = relu(x @ W1 + b1)        (zero padding stays exactly 0)
    pi1 = jnp.dot(x, w_ref[0:128, :], preferred_element_type=jnp.float32) + b[0]
    pi1 = jnp.maximum(pi1, 0.0)

    # layer 2 (policy & value heads fused): h = relu(pi1 @ [W2 | Wv2] + [b2 | bv2])
    h = jnp.dot(pi1.astype(jnp.bfloat16), w_ref[128:256, :],
                preferred_element_type=jnp.float32) + b[1]
    h = jnp.maximum(h, 0.0)

    # layer 3 (block-diagonal): out = h @ [[W3, 0], [0, Wv3]] + [b3 | bv3]
    out = jnp.dot(h.astype(jnp.bfloat16), w_ref[256:384, :],
                  preferred_element_type=jnp.float32) + b[2]

    out_ref[...] = out.astype(out_ref.dtype)


def pack_params(params, s_dim, a_dim):
    """Pack the 10 Linear params into one bf16 weight slab + one f32 bias slab."""
    (w1, b1, w2, b2, w3, b3, wv2, bv2, wv3, bv3) = params
    assert a_dim + 1 <= _LANE and s_dim <= _LANE

    # layer 1: (s_dim, 80) -> 128x128 tile
    w1p = jnp.zeros((_LANE, _LANE), jnp.float32).at[:s_dim, :80].set(w1)

    # layer 2 fused: [W2 | Wv2] (80, 120) -> 128x128 tile
    wcat = jnp.concatenate([w2, wv2], axis=1)
    w2p = jnp.zeros((_LANE, _LANE), jnp.float32).at[:80, :120].set(wcat)

    # layer 3 block-diagonal: [[W3, 0], [0, Wv3]] (120, a_dim+1) -> 128x128 tile
    w3p = (jnp.zeros((_LANE, _LANE), jnp.float32)
           .at[:60, :a_dim].set(w3)
           .at[60:120, a_dim:a_dim + 1].set(wv3))

    w_packed = jnp.concatenate([w1p, w2p, w3p], axis=0).astype(jnp.bfloat16)  # (384, 128)

    b1p = jnp.zeros((_LANE,), jnp.float32).at[:80].set(b1.reshape(-1))
    b2p = jnp.zeros((_LANE,), jnp.float32).at[:120].set(
        jnp.concatenate([b2.reshape(-1), bv2.reshape(-1)]))
    b3p = jnp.zeros((_LANE,), jnp.float32).at[:a_dim + 1].set(
        jnp.concatenate([b3.reshape(-1), bv3.reshape(-1)]))
    b_packed = jnp.stack([b1p, b2p, b3p], axis=0)                             # (3, 128)
    return w_packed, b_packed


def net_forward(x, w_packed, b_packed, a_dim, *, max_batch_tile=256):
    """Run the fused MLP forward; returns (logits, values)."""
    batch, s_dim = x.shape

    # Batch tile: multiple of 16 (bf16 sublane packing); capped so large rollout
    # batches get a multi-step "parallel" grid (shards across v7x TensorCores).
    tb = min(max_batch_tile, _round_up(batch, 16))
    padded_b = _round_up(batch, tb)
    grid = (padded_b // tb,)

    # Pad state rows to the grid and cols to the 128-lane MXU tile; cast to bf16.
    xp = jnp.zeros((padded_b, _LANE), jnp.bfloat16)
    xp = xp.at[:batch, :s_dim].set(x.astype(jnp.bfloat16))

    flops = 2 * batch * (s_dim * 80 + 80 * 120 + 120 * (a_dim + 1))
    bytes_accessed = (w_packed.size * 2 + b_packed.size * 4
                      + xp.size * 2 + padded_b * _LANE * 4)

    out = pl.pallas_call(
        _net_kernel,
        out_shape=jax.ShapeDtypeStruct((padded_b, _LANE), jnp.float32),
        grid=grid,
        in_specs=[
            pl.BlockSpec((tb, _LANE), lambda i: (i, 0)),          # x tile
            pl.BlockSpec((3 * _LANE, _LANE), lambda i: (0, 0)),   # packed weights (resident)
            pl.BlockSpec((3, _LANE), lambda i: (0, 0)),           # packed biases  (resident)
        ],
        out_specs=pl.BlockSpec((tb, _LANE), lambda i: (i, 0)),
        compiler_params=pltpu.CompilerParams(
            dimension_semantics=("parallel",)),
        cost_estimate=pl.CostEstimate(
            flops=flops, transcendentals=0, bytes_accessed=bytes_accessed),
    )(xp, w_packed, b_packed)

    logits = out[:batch, :a_dim]
    values = out[:batch, a_dim:a_dim + 1]
    return logits, values


# ----------------------------- test harness ---------------------------------

def _xavier_uniform(key, fan_in, fan_out, gain):
    limit = gain * jnp.sqrt(6.0 / (fan_in + fan_out))
    return jax.random.uniform(key, (fan_in, fan_out), jnp.float32, -limit, limit)


def init_params(key, s_dim, a_dim):
    # Mirrors the previous script (xavier_uniform on weights and bias rows).
    # TODO(synk): set_init bias handling differs from PyTorch defaults; only
    # affects test data, not kernel numerics.
    gain = jnp.sqrt(2.0)  # calculate_gain('relu')
    keys = jax.random.split(key, 10)
    w1 = _xavier_uniform(keys[0], s_dim, 80, gain)
    b1 = _xavier_uniform(keys[1], 1, 80, gain)
    w2 = _xavier_uniform(keys[2], 80, 60, gain)
    b2 = _xavier_uniform(keys[3], 1, 60, gain)
    w3 = _xavier_uniform(keys[4], 60, a_dim, gain)
    b3 = _xavier_uniform(keys[5], 1, a_dim, gain)
    wv2 = _xavier_uniform(keys[6], 80, 60, gain)
    bv2 = _xavier_uniform(keys[7], 1, 60, gain)
    wv3 = _xavier_uniform(keys[8], 60, 1, gain)
    bv3 = _xavier_uniform(keys[9], 1, 1, gain)
    return (w1, b1, w2, b2, w3, b3, wv2, bv2, wv3, bv3)


def reference_forward_f32(x, params):
    (w1, b1, w2, b2, w3, b3, wv2, bv2, wv3, bv3) = params
    pi1 = jnp.maximum(x @ w1 + b1, 0.0)
    pi2 = jnp.maximum(pi1 @ w2 + b2, 0.0)
    logits = pi2 @ w3 + b3
    v2 = jnp.maximum(pi1 @ wv2 + bv2, 0.0)
    values = v2 @ wv3 + bv3
    return logits, values


def reference_forward_bf16(x, params):
    """Plain-JAX reference using the same bf16-input / f32-accum precision path."""
    (w1, b1, w2, b2, w3, b3, wv2, bv2, wv3, bv3) = params
    bf = jnp.bfloat16
    f32 = jnp.float32
    xb = x.astype(bf)
    pi1 = jnp.maximum(jnp.dot(xb, w1.astype(bf), preferred_element_type=f32) + b1, 0.0)
    pi1b = pi1.astype(bf)
    pi2 = jnp.maximum(jnp.dot(pi1b, w2.astype(bf), preferred_element_type=f32) + b2, 0.0)
    logits = jnp.dot(pi2.astype(bf), w3.astype(bf), preferred_element_type=f32) + b3
    v2 = jnp.maximum(jnp.dot(pi1b, wv2.astype(bf), preferred_element_type=f32) + bv2, 0.0)
    values = jnp.dot(v2.astype(bf), wv3.astype(bf), preferred_element_type=f32) + bv3
    return logits, values


if __name__ == "__main__":
    key = jax.random.PRNGKey(0)
    s_dim, a_dim, batch = 4, 2, 32  # CartPole: 4 state dims, 2 actions

    pkey, xkey = jax.random.split(key)
    params = init_params(pkey, s_dim, a_dim)
    x = jax.random.normal(xkey, (batch, s_dim), jnp.float32)

    w_packed, b_packed = pack_params(params, s_dim, a_dim)
    logits, values = net_forward(x, w_packed, b_packed, a_dim)
    logits, values = jax.block_until_ready((logits, values))

    assert logits.shape == (batch, a_dim) and values.shape == (batch, 1)

    # Tight check vs. a reference with the same bf16/f32-accum precision path.
    ref_lb, ref_vb = reference_forward_bf16(x, params)
    assert jnp.allclose(logits, ref_lb, atol=1e-2, rtol=1e-2)
    assert jnp.allclose(values, ref_vb, atol=1e-2, rtol=1e-2)

    # Looser semantic check vs. the pure-f32 PyTorch-equivalent math.
    ref_l32, ref_v32 = reference_forward_f32(x, params)
    assert jnp.allclose(logits, ref_l32, atol=5e-2, rtol=5e-2)
    assert jnp.allclose(values, ref_v32, atol=5e-2, rtol=5e-2)

    print("KERNEL_OK")
</pallas_src>

<mosaic_0001>
module attributes {stable_mosaic.version = 11 : i64} {
  func.func @_net_kernel(%arg0: i32, %arg1: memref<32x128xbf16, #tpu.memory_space<vmem>>, %arg2: memref<384x128xbf16, #tpu.memory_space<vmem>>, %arg3: memref<3x128xf32, #tpu.memory_space<vmem>>, %arg4: memref<32x128xf32, #tpu.memory_space<vmem>>) attributes {dimension_semantics = [#tpu.dimension_semantics<parallel>], iteration_bounds = array<i64: 1>, scalar_prefetch = 0 : i64, scratch_operands = 0 : i64, tpu.core_type = #tpu.core_type<tc>, window_params = [{transform_indices = @transform_0, window_bounds = array<i64: 32, 128>}, {pipeline_mode = #tpu.pipeline_mode<synchronous>, transform_indices = @transform_1, window_bounds = array<i64: 384, 128>}, {pipeline_mode = #tpu.pipeline_mode<synchronous>, transform_indices = @transform_2, window_bounds = array<i64: 3, 128>}, {transform_indices = @transform_3, window_bounds = array<i64: 32, 128>}]} {
    %c0 = arith.constant 0 : index
    %c0_0 = arith.constant 0 : index
    %0 = vector.load %arg1[%c0, %c0_0] : memref<32x128xbf16, #tpu.memory_space<vmem>>, vector<32x128xbf16>
    %c0_1 = arith.constant 0 : index
    %c0_2 = arith.constant 0 : index
    %1 = vector.load %arg3[%c0_1, %c0_2] : memref<3x128xf32, #tpu.memory_space<vmem>>, vector<3x128xf32>
    %c0_3 = arith.constant 0 : index
    %c0_4 = arith.constant 0 : index
    %2 = vector.load %arg2[%c0_3, %c0_4] : memref<384x128xbf16, #tpu.memory_space<vmem>>, vector<128x128xbf16>
    %cst = arith.constant dense<0.000000e+00> : vector<32x128xf32>
    %3 = tpu.matmul %0, %2, %cst {dimension_numbers = #tpu.dot_dimension_numbers<[1], [0], [0], [1], [0, 0, 1, 1], [], []>} : vector<32x128xbf16>, vector<128x128xbf16>, vector<32x128xf32> -> vector<32x128xf32>
    %4 = vector.extract_strided_slice %1 {offsets = [0, 0], sizes = [1, 128], strides = [1, 1]} : vector<3x128xf32> to vector<1x128xf32>
    %5 = vector.shape_cast %4 : vector<1x128xf32> to vector<128xf32>
    %6 = vector.shape_cast %5 : vector<128xf32> to vector<1x128xf32>
    %7 = vector.broadcast %6 : vector<1x128xf32> to vector<32x128xf32>
    %8 = arith.addf %3, %7 : vector<32x128xf32>
    %cst_5 = arith.constant 0.000000e+00 : f32
    %9 = vector.broadcast %cst_5 : f32 to vector<32x128xf32>
    %10 = arith.maximumf %8, %9 : vector<32x128xf32>
    %11 = arith.truncf %10 : vector<32x128xf32> to vector<32x128xbf16>
    %c128 = arith.constant 128 : index
    %c0_6 = arith.constant 0 : index
    %12 = vector.load %arg2[%c128, %c0_6] : memref<384x128xbf16, #tpu.memory_space<vmem>>, vector<128x128xbf16>
    %cst_7 = arith.constant dense<0.000000e+00> : vector<32x128xf32>
    %13 = tpu.matmul %11, %12, %cst_7 {dimension_numbers = #tpu.dot_dimension_numbers<[1], [0], [0], [1], [0, 0, 1, 1], [], []>} : vector<32x128xbf16>, vector<128x128xbf16>, vector<32x128xf32> -> vector<32x128xf32>
    %14 = vector.extract_strided_slice %1 {offsets = [1, 0], sizes = [1, 128], strides = [1, 1]} : vector<3x128xf32> to vector<1x128xf32>
    %15 = vector.shape_cast %14 : vector<1x128xf32> to vector<128xf32>
    %16 = vector.shape_cast %15 : vector<128xf32> to vector<1x128xf32>
    %17 = vector.broadcast %16 : vector<1x128xf32> to vector<32x128xf32>
    %18 = arith.addf %13, %17 : vector<32x128xf32>
    %cst_8 = arith.constant 0.000000e+00 : f32
    %19 = vector.broadcast %cst_8 : f32 to vector<32x128xf32>
    %20 = arith.maximumf %18, %19 : vector<32x128xf32>
    %21 = arith.truncf %20 : vector<32x128xf32> to vector<32x128xbf16>
    %c256 = arith.constant 256 : index
    %c0_9 = arith.constant 0 : index
    %22 = vector.load %arg2[%c256, %c0_9] : memref<384x128xbf16, #tpu.memory_space<vmem>>, vector<128x128xbf16>
    %cst_10 = arith.constant dense<0.000000e+00> : vector<32x128xf32>
    %23 = tpu.matmul %21, %22, %cst_10 {dimension_numbers = #tpu.dot_dimension_numbers<[1], [0], [0], [1], [0, 0, 1, 1], [], []>} : vector<32x128xbf16>, vector<128x128xbf16>, vector<32x128xf32> -> vector<32x128xf32>
    %24 = vector.extract_strided_slice %1 {offsets = [2, 0], sizes = [1, 128], strides = [1, 1]} : vector<3x128xf32> to vector<1x128xf32>
    %25 = vector.shape_cast %24 : vector<1x128xf32> to vector<128xf32>
    %26 = vector.shape_cast %25 : vector<128xf32> to vector<1x128xf32>
    %27 = vector.broadcast %26 : vector<1x128xf32> to vector<32x128xf32>
    %28 = arith.addf %23, %27 : vector<32x128xf32>
    %c0_11 = arith.constant 0 : index
    %c0_12 = arith.constant 0 : index
    %29 = vector.load %arg4[%c0_11, %c0_12] : memref<32x128xf32, #tpu.memory_space<vmem>>, vector<32x128xf32>
    tpu.vector_store %arg4[%c0_11, %c0_12], %28 {strides = array<i32>} : memref<32x128xf32, #tpu.memory_space<vmem>>, vector<32x128xf32>,
    return
  }
  func.func @transform_0(%arg0: i32) -> (i32, i32) {
    %c0_i32 = arith.constant 0 : i32
    %c0_i32_0 = arith.constant 0 : i32
    return %arg0, %c0_i32 : i32, i32
  }
  func.func @transform_1(%arg0: i32) -> (i32, i32) {
    %c0_i32 = arith.constant 0 : i32
    %c0_i32_0 = arith.constant 0 : i32
    %c0_i32_1 = arith.constant 0 : i32
    return %c0_i32, %c0_i32_0 : i32, i32
  }
  func.func @transform_2(%arg0: i32) -> (i32, i32) {
    %c0_i32 = arith.constant 0 : i32
    %c0_i32_0 = arith.constant 0 : i32
    %c0_i32_1 = arith.constant 0 : i32
    return %c0_i32, %c0_i32_0 : i32, i32
  }
  func.func @transform_3(%arg0: i32) -> (i32, i32) {
    %c0_i32 = arith.constant 0 : i32
    %c0_i32_0 = arith.constant 0 : i32
    return %arg0, %c0_i32 : i32, i32
  }
}

</mosaic_0001>

<llo_original>
// kernel: tpu_custom_call.1
$region0: #{tpu_custom_call.1}
  #allocation0 [shape = 'u32[]', space=smem, size = 0x4, offset = 0x4, fixed_abs, tag = 'smem constant byte address 0x4 - core index']
  #allocation1 [shape = 'u32[144,128]{1,0:T(1,128)}', space=vmem, size = 0x12000, scoped, tag = 'internal scratch']
  %s0 = inlined_call_operand.hbm [shape: bf16[32,128], index: 0, kind: input, shape index: {}]
  %s1 = inlined_call_operand.hbm [shape: bf16[384,128], index: 1, kind: input, shape index: {}]
  %s2 = inlined_call_operand.vmem [shape: f32[3,128], index: 2, kind: input, shape index: {}]
  %s3 = inlined_call_operand.hbm [shape: f32[32,128], index: 3, kind: output, shape index: {}]
  %s4 = sld [smem:[#allocation0]]
  $region30: #{tpu_custom_call.1} parent=0
    _
  %s6 = ssub.s32 1, %s4
  %s7 = scalar_select 0, %s6, %s4
  $region1: #{tpu_custom_call.1} parent=0
    #allocation2 [shape = 'u8[8192]{0}', space=vmem, size = 0x2000, scoped, tag = 'input window, operand 0, single buffered']
    #allocation3 [shape = 's32[1]{0}', space=sflag, size = 0x4, scoped, tag = 'scoped memory for tpu_custom_call.1']
    #allocation4 [shape = 's32[1]{0}', space=sflag, size = 0x4, scoped, tag = 'scoped memory for tpu_custom_call.1']
    #allocation5 [shape = 'u8[98304]{0}', space=vmem, size = 0x18000, scoped, tag = 'input window, operand 1, single buffered']
    #allocation6 [shape = 's32[1]{0}', space=sflag, size = 0x4, scoped, tag = 'scoped memory for tpu_custom_call.1']
    #allocation7 [shape = 'u8[16384]{0}', space=vmem, size = 0x4000, scoped, tag = 'output window, operand 0, single buffered']
    %8 = vsyncpa [#allocation3], 0
    %9 = vsyncpa [#allocation6], 0
    %10 = vsyncpa [#allocation4], 0
    // Predicated region
    $region2: #{tpu_custom_call.1} parent=1 // pred_check
      _
    $region3: #{tpu_custom_call.1} parent=1 // pred_check_branch
      %12 = sbr.rel (0) target = $region5
    $region4: #{tpu_custom_call.1} parent=1 // pred_region
      %s14 = ssub.s32 256, 256
      %15 = vsyncadd [#allocation3], %s14
      %s16 = sshll.u32 [#allocation2], 4
      %s17 = int_to_ptr.vmem [resolvable:$true] %s16
      %22 = dma.hbm_to_vmem [thread:$0]  %s0, 256, %s17, [#allocation3], 64, 64, 4
    $region5: #{tpu_custom_call.1} parent=1 // pred_fallthru
      _
    // Predicated region
    $region6: #{tpu_custom_call.1} parent=1 // pred_check
      _
    $region7: #{tpu_custom_call.1} parent=1 // pred_check_branch
      %24 = sbr.rel (0) target = $region9
    $region8: #{tpu_custom_call.1} parent=1 // pred_region
      %s26 = ssub.s32 3072, 3072
      %27 = vsyncadd [#allocation6], %s26
      %s28 = sshll.u32 [#allocation5], 4
      %s29 = int_to_ptr.vmem [resolvable:$true] %s28
      %34 = dma.hbm_to_vmem [thread:$0]  %s1, 3072, %s29, [#allocation6], 64, 64, 4
    $region9: #{tpu_custom_call.1} parent=1 // pred_fallthru
      _
    // Predicated region
    $region10: #{tpu_custom_call.1} parent=1 // pred_check
      _
    $region11: #{tpu_custom_call.1} parent=1 // pred_check_branch
      %36 = sbr.rel (0) target = $region13
    $region12: #{tpu_custom_call.1} parent=1 // pred_region
      _
    $region13: #{tpu_custom_call.1} parent=1 // pred_fallthru
      _
    // Predicated region
    $region14: #{tpu_custom_call.1} parent=1 // pred_check
      _
    $region15: #{tpu_custom_call.1} parent=1 // pred_check_branch
      %38 = sbr.rel (0) target = $region17
    $region16: #{tpu_custom_call.1} parent=1 // pred_region
      %39 = dma.done [#allocation3], 256
    $region17: #{tpu_custom_call.1} parent=1 // pred_fallthru
      _
    // Predicated region
    $region18: #{tpu_custom_call.1} parent=1 // pred_check
      _
    $region19: #{tpu_custom_call.1} parent=1 // pred_check_branch
      %41 = sbr.rel (0) target = $region21
    $region20: #{tpu_custom_call.1} parent=1 // pred_region
      %42 = dma.done [#allocation6], 3072
    $region21: #{tpu_custom_call.1} parent=1 // pred_fallthru
      _
    %v44 = vld [vmem:[#allocation2] sm:$0xf]
    %v45 = vld [vmem:[#allocation2 + $0x4] sm:$0xf]
    %v46 = vld [vmem:[#allocation2 + $0x8] sm:$0xf]
    %v47 = vld [vmem:[#allocation2 + $0xc] sm:$0xf]
    %v48 = vld [vmem:[%s2] sm:$0x7]
    %v49 = vld [vmem:[#allocation5] sm:$0xf]
    %v50 = vld [vmem:[#allocation5 + $0x4] sm:$0xf]
    %v51 = vld [vmem:[#allocation5 + $0x8] sm:$0xf]
    %v52 = vld [vmem:[#allocation5 + $0xc] sm:$0xf]
    %v53 = vld [vmem:[#allocation5 + $0x10] sm:$0xf]
    %v54 = vld [vmem:[#allocation5 + $0x14] sm:$0xf]
    %v55 = vld [vmem:[#allocation5 + $0x18] sm:$0xf]
    %v56 = vld [vmem:[#allocation5 + $0x1c] sm:$0xf]
    %v57 = vld [vmem:[#allocation5 + $0x20] sm:$0xf]
    %v58 = vld [vmem:[#allocation5 + $0x24] sm:$0xf]
    %v59 = vld [vmem:[#allocation5 + $0x28] sm:$0xf]
    %v60 = vld [vmem:[#allocation5 + $0x2c] sm:$0xf]
    %v61 = vld [vmem:[#allocation5 + $0x30] sm:$0xf]
    %v62 = vld [vmem:[#allocation5 + $0x34] sm:$0xf]
    %v63 = vld [vmem:[#allocation5 + $0x38] sm:$0xf]
    %v64 = vld [vmem:[#allocation5 + $0x3c] sm:$0xf]
    %v65 = vlaneseq
    %v66 = vshrl.u32 %v65, 7
    %v67 = vsub.s32 0, %v66
    %v68 = vrot.slane %v48, %v67
    %v73 = vunpack.c.l.b16 %v44
    %v74 = vunpack.c.l.b16 %v45
    %v75 = vunpack.c.l.b16 %v46
    %v76 = vunpack.c.l.b16 %v47
    %v77 = vpack.c.b16 %v74, %v73
    %v78 = vpack.c.b16 %v76, %v75
    %v97 = vunpack.c.l.b16 %v49
    %v98 = vunpack.c.l.b16 %v50
    %v99 = vunpack.c.l.b16 %v51
    %v100 = vunpack.c.l.b16 %v52
    %v101 = vunpack.c.l.b16 %v53
    %v102 = vunpack.c.l.b16 %v54
    %v103 = vunpack.c.l.b16 %v55
    %v104 = vunpack.c.l.b16 %v56
    %v105 = vunpack.c.l.b16 %v57
    %v106 = vunpack.c.l.b16 %v58
    %v107 = vunpack.c.l.b16 %v59
    %v108 = vunpack.c.l.b16 %v60
    %v109 = vunpack.c.l.b16 %v61
    %v110 = vunpack.c.l.b16 %v62
    %v111 = vunpack.c.l.b16 %v63
    %v112 = vunpack.c.l.b16 %v64
    %v113 = vpack.c.b16 %v98, %v97
    %v114 = vpack.c.b16 %v100, %v99
    %v115 = vpack.c.b16 %v102, %v101
    %v116 = vpack.c.b16 %v104, %v103
    %v117 = vpack.c.b16 %v106, %v105
    %v118 = vpack.c.b16 %v108, %v107
    %v119 = vpack.c.b16 %v110, %v109
    %v120 = vpack.c.b16 %v112, %v111
    %129 = vmatprep.subr.bf16.mxu0 0
    %130 = vmatpush1.bf16.msra.mxu0 %v113
    %131 = vmatprep.subr.bf16.mxu0 0
    %132 = vmatpush1.bf16.msra.mxu0 %v114
    %133 = vmatprep.subr.bf16.mxu0 0
    %134 = vmatpush1.bf16.msra.mxu0 %v115
    %135 = vmatprep.subr.bf16.mxu0 0
    %136 = vmatpush1.bf16.msra.mxu0 %v116
    %137 = vmatprep.subr.bf16.mxu0 0
    %138 = vmatpush1.bf16.msra.mxu0 %v117
    %139 = vmatprep.subr.bf16.mxu0 0
    %140 = vmatpush1.bf16.msra.mxu0 %v118
    %141 = vmatprep.subr.bf16.mxu0 0
    %142 = vmatpush1.bf16.msra.mxu0 %v119
    %143 = vmatprep.subr.bf16.mxu0 0
    %144 = vmatpush1.bf16.msra.mxu0 %v120
    %145 = vmatprep.subr.bf16.mxu0 0
    %146 = vmatpush1.bf16.msra.mxu0 0
    %147 = vmatprep.subr.bf16.mxu0 0
    %148 = vmatpush1.bf16.msra.mxu0 0
    %149 = vmatprep.subr.bf16.mxu0 0
    %150 = vmatpush1.bf16.msra.mxu0 0
    %151 = vmatprep.subr.bf16.mxu0 0
    %152 = vmatpush1.bf16.msra.mxu0 0
    %153 = vmatprep.subr.bf16.mxu0 0
    %154 = vmatpush1.bf16.msra.mxu0 0
    %155 = vmatprep.subr.bf16.mxu0 0
    %156 = vmatpush1.bf16.msra.mxu0 0
    %157 = vmatprep.subr.bf16.mxu0 0
    %158 = vmatpush1.bf16.msra.mxu0 0
    %159 = vmatprep.subr.bf16.mxu0 0
    %160 = vmatpush1.bf16.msra.mxu0 0
    %161 = vmatprep.mubr.bf16.mxu0 0
    %162 = vmatmul.mubr.bf16.gmra.mrb[0].mxu0 %v77
    %v163 = vpop.f32.mrb[0].mxu0
    %v164 = vadd.f32 %v68, %v163
    %v165 = vpop.f32.mrb[0].mxu0
    %v166 = vpop.f32.mrb[0].mxu0
    %v167 = vadd.f32 %v68, %v166
    %v168 = vpop.f32.mrb[0].mxu0
    %169 = vmatprep.mubr.bf16.mxu0 0
    %170 = vmatmul.mubr.bf16.gmra.mrb[0].mxu0 %v78
    %v171 = vpop.f32.mrb[0].mxu0
    %v172 = vadd.f32 %v68, %v171
    %v173 = vpop.f32.mrb[0].mxu0
    %v174 = vpop.f32.mrb[0].mxu0
    %v175 = vadd.f32 %v68, %v174
    %v176 = vpop.f32.mrb[0].mxu0
    %177 = vdwg.mxu0
    %v178 = vmax.f32 %v164, 0.0
    %v179 = vmax.f32 %v167, 0.0
    %v180 = vmax.f32 %v172, 0.0
    %v181 = vmax.f32 %v175, 0.0
    %v182 = vpack.c.bf16 %v179, %v178
    %v183 = vpack.c.bf16 %v181, %v180
    %v184 = vld [vmem:[#allocation5 + $0x40] sm:$0xf]
    %v185 = vld [vmem:[#allocation5 + $0x44] sm:$0xf]
    %v186 = vld [vmem:[#allocation5 + $0x48] sm:$0xf]
    %v187 = vld [vmem:[#allocation5 + $0x4c] sm:$0xf]
    %v188 = vld [vmem:[#allocation5 + $0x50] sm:$0xf]
    %v189 = vld [vmem:[#allocation5 + $0x54] sm:$0xf]
    %v190 = vld [vmem:[#allocation5 + $0x58] sm:$0xf]
    %v191 = vld [vmem:[#allocation5 + $0x5c] sm:$0xf]
    %v192 = vld [vmem:[#allocation5 + $0x60] sm:$0xf]
    %v193 = vld [vmem:[#allocation5 + $0x64] sm:$0xf]
    %v194 = vld [vmem:[#allocation5 + $0x68] sm:$0xf]
    %v195 = vld [vmem:[#allocation5 + $0x6c] sm:$0xf]
    %v196 = vld [vmem:[#allocation5 + $0x70] sm:$0xf]
    %v197 = vld [vmem:[#allocation5 + $0x74] sm:$0xf]
    %v198 = vld [vmem:[#allocation5 + $0x78] sm:$0xf]
    %v199 = vld [vmem:[#allocation5 + $0x7c] sm:$0xf]
    %v200 = vlaneseq
    %v201 = vshrl.u32 %v200, 7
    %v202 = vsub.s32 1, %v201
    %v203 = vrot.slane %v48, %v202
    %v220 = vunpack.c.l.b16 %v184
    %v221 = vunpack.c.l.b16 %v185
    %v222 = vunpack.c.l.b16 %v186
    %v223 = vunpack.c.l.b16 %v187
    %v224 = vunpack.c.l.b16 %v188
    %v225 = vunpack.c.l.b16 %v189
    %v226 = vunpack.c.l.b16 %v190
    %v227 = vunpack.c.l.b16 %v191
    %v228 = vunpack.c.l.b16 %v192
    %v229 = vunpack.c.l.b16 %v193
    %v230 = vunpack.c.l.b16 %v194
    %v231 = vunpack.c.l.b16 %v195
    %v232 = vunpack.c.l.b16 %v196
    %v233 = vunpack.c.l.b16 %v197
    %v234 = vunpack.c.l.b16 %v198
    %v235 = vunpack.c.l.b16 %v199
    %v236 = vpack.c.b16 %v221, %v220
    %v237 = vpack.c.b16 %v223, %v222
    %v238 = vpack.c.b16 %v225, %v224
    %v239 = vpack.c.b16 %v227, %v226
    %v240 = vpack.c.b16 %v229, %v228
    %v241 = vpack.c.b16 %v231, %v230
    %v242 = vpack.c.b16 %v233, %v232
    %v243 = vpack.c.b16 %v235, %v234
    %252 = vmatprep.subr.bf16.mxu0 0
    %253 = vmatpush1.bf16.msra.mxu0 %v236
    %254 = vmatprep.subr.bf16.mxu0 0
    %255 = vmatpush1.bf16.msra.mxu0 %v237
    %256 = vmatprep.subr.bf16.mxu0 0
    %257 = vmatpush1.bf16.msra.mxu0 %v238
    %258 = vmatprep.subr.bf16.mxu0 0
    %259 = vmatpush1.bf16.msra.mxu0 %v239
    %260 = vmatprep.subr.bf16.mxu0 0
    %261 = vmatpush1.bf16.msra.mxu0 %v240
    %262 = vmatprep.subr.bf16.mxu0 0
    %263 = vmatpush1.bf16.msra.mxu0 %v241
    %264 = vmatprep.subr.bf16.mxu0 0
    %265 = vmatpush1.bf16.msra.mxu0 %v242
    %266 = vmatprep.subr.bf16.mxu0 0
    %267 = vmatpush1.bf16.msra.mxu0 %v243
    %268 = vmatprep.subr.bf16.mxu0 0
    %269 = vmatpush1.bf16.msra.mxu0 0
    %270 = vmatprep.subr.bf16.mxu0 0
    %271 = vmatpush1.bf16.msra.mxu0 0
    %272 = vmatprep.subr.bf16.mxu0 0
    %273 = vmatpush1.bf16.msra.mxu0 0
    %274 = vmatprep.subr.bf16.mxu0 0
    %275 = vmatpush1.bf16.msra.mxu0 0
    %276 = vmatprep.subr.bf16.mxu0 0
    %277 = vmatpush1.bf16.msra.mxu0 0
    %278 = vmatprep.subr.bf16.mxu0 0
    %279 = vmatpush1.bf16.msra.mxu0 0
    %280 = vmatprep.subr.bf16.mxu0 0
    %281 = vmatpush1.bf16.msra.mxu0 0
    %282 = vmatprep.subr.bf16.mxu0 0
    %283 = vmatpush1.bf16.msra.mxu0 0
    %284 = vmatprep.mubr.bf16.mxu0 0
    %285 = vmatmul.mubr.bf16.gmra.mrb[0].mxu0 %v182
    %v286 = vpop.f32.mrb[0].mxu0
    %v287 = vadd.f32 %v203, %v286
    %v288 = vpop.f32.mrb[0].mxu0
    %v289 = vpop.f32.mrb[0].mxu0
    %v290 = vadd.f32 %v203, %v289
    %v291 = vpop.f32.mrb[0].mxu0
    %292 = vmatprep.mubr.bf16.mxu0 0
    %293 = vmatmul.mubr.bf16.gmra.mrb[0].mxu0 %v183
    %v294 = vpop.f32.mrb[0].mxu0
    %v295 = vadd.f32 %v203, %v294
    %v296 = vpop.f32.mrb[0].mxu0
    %v297 = vpop.f32.mrb[0].mxu0
    %v298 = vadd.f32 %v203, %v297
    %v299 = vpop.f32.mrb[0].mxu0
    %300 = vdwg.mxu0
    %v301 = vmax.f32 %v287, 0.0
    %v302 = vmax.f32 %v290, 0.0
    %v303 = vmax.f32 %v295, 0.0
    %v304 = vmax.f32 %v298, 0.0
    %v305 = vpack.c.bf16 %v302, %v301
    %v306 = vpack.c.bf16 %v304, %v303
    %v307 = vld [vmem:[#allocation5 + $0x80] sm:$0xf]
    %v308 = vld [vmem:[#allocation5 + $0x84] sm:$0xf]
    %v309 = vld [vmem:[#allocation5 + $0x88] sm:$0xf]
    %v310 = vld [vmem:[#allocation5 + $0x8c] sm:$0xf]
    %v311 = vld [vmem:[#allocation5 + $0x90] sm:$0xf]
    %v312 = vld [vmem:[#allocation5 + $0x94] sm:$0xf]
    %v313 = vld [vmem:[#allocation5 + $0x98] sm:$0xf]
    %v314 = vld [vmem:[#allocation5 + $0x9c] sm:$0xf]
    %v315 = vld [vmem:[#allocation5 + $0xa0] sm:$0xf]
    %v316 = vld [vmem:[#allocation5 + $0xa4] sm:$0xf]
    %v317 = vld [vmem:[#allocation5 + $0xa8] sm:$0xf]
    %v318 = vld [vmem:[#allocation5 + $0xac] sm:$0xf]
    %v319 = vld [vmem:[#allocation5 + $0xb0] sm:$0xf]
    %v320 = vld [vmem:[#allocation5 + $0xb4] sm:$0xf]
    %v321 = vld [vmem:[#allocation5 + $0xb8] sm:$0xf]
    %v322 = vld [vmem:[#allocation5 + $0xbc] sm:$0xf]
    %v323 = vlaneseq
    %v324 = vshrl.u32 %v323, 7
    %v325 = vsub.s32 2, %v324
    %v326 = vrot.slane %v48, %v325
    %v343 = vunpack.c.l.b16 %v307
    %v344 = vunpack.c.l.b16 %v308
    %v345 = vunpack.c.l.b16 %v309
    %v346 = vunpack.c.l.b16 %v310
    %v347 = vunpack.c.l.b16 %v311
    %v348 = vunpack.c.l.b16 %v312
    %v349 = vunpack.c.l.b16 %v313
    %v350 = vunpack.c.l.b16 %v314
    %v351 = vunpack.c.l.b16 %v315
    %v352 = vunpack.c.l.b16 %v316
    %v353 = vunpack.c.l.b16 %v317
    %v354 = vunpack.c.l.b16 %v318
    %v355 = vunpack.c.l.b16 %v319
    %v356 = vunpack.c.l.b16 %v320
    %v357 = vunpack.c.l.b16 %v321
    %v358 = vunpack.c.l.b16 %v322
    %v359 = vpack.c.b16 %v344, %v343
    %v360 = vpack.c.b16 %v346, %v345
    %v361 = vpack.c.b16 %v348, %v347
    %v362 = vpack.c.b16 %v350, %v349
    %v363 = vpack.c.b16 %v352, %v351
    %v364 = vpack.c.b16 %v354, %v353
    %v365 = vpack.c.b16 %v356, %v355
    %v366 = vpack.c.b16 %v358, %v357
    %375 = vmatprep.subr.bf16.mxu0 0
    %376 = vmatpush1.bf16.msra.mxu0 %v359
    %377 = vmatprep.subr.bf16.mxu0 0
    %378 = vmatpush1.bf16.msra.mxu0 %v360
    %379 = vmatprep.subr.bf16.mxu0 0
    %380 = vmatpush1.bf16.msra.mxu0 %v361
    %381 = vmatprep.subr.bf16.mxu0 0
    %382 = vmatpush1.bf16.msra.mxu0 %v362
    %383 = vmatprep.subr.bf16.mxu0 0
    %384 = vmatpush1.bf16.msra.mxu0 %v363
    %385 = vmatprep.subr.bf16.mxu0 0
    %386 = vmatpush1.bf16.msra.mxu0 %v364
    %387 = vmatprep.subr.bf16.mxu0 0
    %388 = vmatpush1.bf16.msra.mxu0 %v365
    %389 = vmatprep.subr.bf16.mxu0 0
    %390 = vmatpush1.bf16.msra.mxu0 %v366
    %391 = vmatprep.subr.bf16.mxu0 0
    %392 = vmatpush1.bf16.msra.mxu0 0
    %393 = vmatprep.subr.bf16.mxu0 0
    %394 = vmatpush1.bf16.msra.mxu0 0
    %395 = vmatprep.subr.bf16.mxu0 0
    %396 = vmatpush1.bf16.msra.mxu0 0
    %397 = vmatprep.subr.bf16.mxu0 0
    %398 = vmatpush1.bf16.msra.mxu0 0
    %399 = vmatprep.subr.bf16.mxu0 0
    %400 = vmatpush1.bf16.msra.mxu0 0
    %401 = vmatprep.subr.bf16.mxu0 0
    %402 = vmatpush1.bf16.msra.mxu0 0
    %403 = vmatprep.subr.bf16.mxu0 0
    %404 = vmatpush1.bf16.msra.mxu0 0
    %405 = vmatprep.subr.bf16.mxu0 0
    %406 = vmatpush1.bf16.msra.mxu0 0
    %407 = vmatprep.mubr.bf16.mxu0 0
    %408 = vmatmul.mubr.bf16.gmra.mrb[0].mxu0 %v305
    %v409 = vpop.f32.mrb[0].mxu0
    %v410 = vadd.f32 %v326, %v409
    %v411 = vpop.f32.mrb[0].mxu0
    %v412 = vpop.f32.mrb[0].mxu0
    %v413 = vadd.f32 %v326, %v412
    %v414 = vpop.f32.mrb[0].mxu0
    %415 = vmatprep.mubr.bf16.mxu0 0
    %416 = vmatmul.mubr.bf16.gmra.mrb[0].mxu0 %v306
    %v417 = vpop.f32.mrb[0].mxu0
    %v418 = vadd.f32 %v326, %v417
    %v419 = vpop.f32.mrb[0].mxu0
    %v420 = vpop.f32.mrb[0].mxu0
    %v421 = vadd.f32 %v326, %v420
    %v422 = vpop.f32.mrb[0].mxu0
    %423 = vdwg.mxu0
    %424 = vst [vmem:[#allocation7] sm:$0xff] %v410
    %425 = vst [vmem:[#allocation7 + $0x8] sm:$0xff] %v413
    %426 = vst [vmem:[#allocation7 + $0x10] sm:$0xff] %v418
    %427 = vst [vmem:[#allocation7 + $0x18] sm:$0xff] %v421
    // Predicated region
    $region22: #{tpu_custom_call.1} parent=1 // pred_check
      _
    $region23: #{tpu_custom_call.1} parent=1 // pred_check_branch
      %429 = sbr.rel (0) target = $region25
    $region24: #{tpu_custom_call.1} parent=1 // pred_region
      %s431 = ssub.s32 512, 512
      %432 = vsyncadd [#allocation4], %s431
      %s433 = sshll.u32 [#allocation7], 4
      %s434 = int_to_ptr.vmem [resolvable:$true] %s433
      %439 = dma.vmem_to_hbm [thread:$0]  %s434, 512, %s3, [#allocation4], 128, 128, 8
    $region25: #{tpu_custom_call.1} parent=1 // pred_fallthru
      _
    // Predicated region
    $region26: #{tpu_custom_call.1} parent=1 // pred_check
      _
    $region27: #{tpu_custom_call.1} parent=1 // pred_check_branch
      %441 = sbr.rel (0) target = $region29
    $region28: #{tpu_custom_call.1} parent=1 // pred_region
      %442 = dma.done [#allocation4], 512
    $region29: #{tpu_custom_call.1} parent=1 // pred_fallthru
      _
    %443 = vsyncpa [#allocation3], 1
    %444 = vsyncpa [#allocation6], 1
    %445 = vsyncpa [#allocation4], 1

</llo_original>
